<compile_context>
chip_gen: v7x
topology: tpu7x:2x2x1
jax: 0.10.0
libtpu: 0.0.40
codegen_flags: <defaults>
</compile_context>

<pallas_src>
import jax
import jax.numpy as jnp
from jax.experimental import pallas as pl
from jax.experimental.pallas import tpu as pltpu


def _round_up(x: int, m: int) -> int:
    return ((x + m - 1) // m) * m


def shortcut_kernel(x_ref, w_ref, shift_ref, o_ref):
    # x_ref: (TM, K) bf16, w_ref: (K, N) bf16 (BN scale pre-folded),
    # shift_ref: (1, N) f32, o_ref: (TM, N)
    y = jnp.dot(x_ref[...], w_ref[...], preferred_element_type=jnp.float32)
    o_ref[...] = (y + shift_ref[...]).astype(o_ref.dtype)


def identity_shortcut(x_nchw, conv_w, bn_gamma, bn_beta, bn_mean, bn_var,
                      *, stride=2, eps=1e-5, compute_dtype=jnp.bfloat16):
    B, C_in, H, W = x_nchw.shape
    C_out = conv_w.shape[0]

    # 1x1 stride-s conv == strided spatial subsample + channel matmul.
    # TODO(synk): fuse the subsample / NCHW<->NHWC layout passes into the
    # kernel (BlockSpec over (b, h) tiles with in-kernel channel-to-lane
    # rearrange) to save an extra HBM round trip on memory-bound shapes.
    xs = x_nchw[:, :, ::stride, ::stride]                 # [B, C_in, Ho, Wo]
    Ho, Wo = xs.shape[2], xs.shape[3]
    x_mat = jnp.transpose(xs, (0, 2, 3, 1)).reshape(B * Ho * Wo, C_in)

    # Fold inference-mode BatchNorm: scale goes into the weights, shift stays.
    inv_std = jax.lax.rsqrt(bn_var.astype(jnp.float32) + eps)
    scale = bn_gamma.astype(jnp.float32) * inv_std                   # [C_out]
    shift = bn_beta.astype(jnp.float32) - bn_mean.astype(jnp.float32) * scale
    w_mat = conv_w.reshape(C_out, C_in).astype(jnp.float32).T * scale[None, :]

    # Pad channels to a lane-dense multiple of 128, rows to a tile multiple.
    K = _round_up(C_in, 128)
    N = _round_up(C_out, 128)
    R = x_mat.shape[0]
    TM = min(512, _round_up(R, 8))          # multiple of 8, capped for VMEM
    R_pad = _round_up(R, TM)

    x_p = jnp.zeros((R_pad, K), compute_dtype).at[:R, :C_in].set(
        x_mat.astype(compute_dtype))
    w_p = jnp.zeros((K, N), compute_dtype).at[:C_in, :C_out].set(
        w_mat.astype(compute_dtype))
    shift_p = jnp.zeros((1, N), jnp.float32).at[0, :C_out].set(shift)

    out_mat = pl.pallas_call(
        shortcut_kernel,
        out_shape=jax.ShapeDtypeStruct((R_pad, N), x_nchw.dtype),
        grid=(R_pad // TM,),
        in_specs=[
            pl.BlockSpec((TM, K), lambda i: (i, 0)),     # streamed rows
            pl.BlockSpec((K, N), lambda i: (0, 0)),      # resident weights
            pl.BlockSpec((1, N), lambda i: (0, 0)),      # resident shift
        ],
        out_specs=pl.BlockSpec((TM, N), lambda i: (i, 0)),
        compiler_params=pltpu.CompilerParams(
            dimension_semantics=("parallel",)),
    )(x_p, w_p, shift_p)

    out = out_mat[:R, :C_out].reshape(B, Ho, Wo, C_out)
    return out.transpose(0, 3, 1, 2)                      # back to NCHW


if __name__ == "__main__":
    B, C_in, C_out, H, W, stride = 2, 4, 8, 16, 16, 2

    key = jax.random.PRNGKey(0)
    kx, kw, kg, kb, km, kv = jax.random.split(key, 6)

    x = jax.random.normal(kx, (B, C_in, H, W), dtype=jnp.float32)
    conv_w = jax.random.normal(kw, (C_out, C_in, 1, 1), dtype=jnp.float32) * 0.1
    bn_gamma = 1.0 + 0.1 * jax.random.normal(kg, (C_out,), dtype=jnp.float32)
    bn_beta = 0.1 * jax.random.normal(kb, (C_out,), dtype=jnp.float32)
    bn_mean = 0.1 * jax.random.normal(km, (C_out,), dtype=jnp.float32)
    bn_var = jnp.abs(jax.random.normal(kv, (C_out,), dtype=jnp.float32)) + 0.5

    out = identity_shortcut(x, conv_w, bn_gamma, bn_beta, bn_mean, bn_var,
                            stride=stride)
    out = jax.block_until_ready(out)

    # Pure-JAX f32 reference (1x1 strided conv + inference BN).
    xs = x[:, :, ::stride, ::stride]
    y_ref = jnp.einsum("bchw,oc->bohw", xs, conv_w.reshape(C_out, C_in))
    inv_std = jax.lax.rsqrt(bn_var + 1e-5)
    y_ref = (y_ref - bn_mean[None, :, None, None]) * (
        bn_gamma * inv_std)[None, :, None, None] + bn_beta[None, :, None, None]

    assert out.shape == (B, C_out, H // stride, W // stride)
    # Kernel computes in bf16 (MXU) with f32 accumulation -> looser tolerance.
    assert jnp.allclose(out, y_ref, atol=3e-2, rtol=3e-2)
    print("KERNEL_OK")
</pallas_src>

<mosaic_0001>
module attributes {stable_mosaic.version = 11 : i64} {
  func.func @shortcut_kernel(%arg0: i32, %arg1: memref<128x128xbf16, #tpu.memory_space<vmem>>, %arg2: memref<128x128xbf16, #tpu.memory_space<vmem>>, %arg3: memref<1x128xf32, #tpu.memory_space<vmem>>, %arg4: memref<128x128xf32, #tpu.memory_space<vmem>>) attributes {dimension_semantics = [#tpu.dimension_semantics<parallel>], iteration_bounds = array<i64: 1>, scalar_prefetch = 0 : i64, scratch_operands = 0 : i64, tpu.core_type = #tpu.core_type<tc>, window_params = [{transform_indices = @transform_0, window_bounds = array<i64: 128, 128>}, {pipeline_mode = #tpu.pipeline_mode<synchronous>, transform_indices = @transform_1, window_bounds = array<i64: 128, 128>}, {pipeline_mode = #tpu.pipeline_mode<synchronous>, transform_indices = @transform_2, window_bounds = array<i64: 1, 128>}, {transform_indices = @transform_3, window_bounds = array<i64: 128, 128>}]} {
    %c0 = arith.constant 0 : index
    %c0_0 = arith.constant 0 : index
    %0 = vector.load %arg1[%c0, %c0_0] : memref<128x128xbf16, #tpu.memory_space<vmem>>, vector<128x128xbf16>
    %c0_1 = arith.constant 0 : index
    %c0_2 = arith.constant 0 : index
    %1 = vector.load %arg2[%c0_1, %c0_2] : memref<128x128xbf16, #tpu.memory_space<vmem>>, vector<128x128xbf16>
    %cst = arith.constant dense<0.000000e+00> : vector<128x128xf32>
    %2 = tpu.matmul %0, %1, %cst {dimension_numbers = #tpu.dot_dimension_numbers<[1], [0], [0], [1], [0, 0, 1, 1], [], []>} : vector<128x128xbf16>, vector<128x128xbf16>, vector<128x128xf32> -> vector<128x128xf32>
    %c0_3 = arith.constant 0 : index
    %c0_4 = arith.constant 0 : index
    %3 = vector.load %arg3[%c0_3, %c0_4] : memref<1x128xf32, #tpu.memory_space<vmem>>, vector<1x128xf32>
    %4 = vector.broadcast %3 : vector<1x128xf32> to vector<128x128xf32>
    %5 = arith.addf %2, %4 : vector<128x128xf32>
    %c0_5 = arith.constant 0 : index
    %c0_6 = arith.constant 0 : index
    %6 = vector.load %arg4[%c0_5, %c0_6] : memref<128x128xf32, #tpu.memory_space<vmem>>, vector<128x128xf32>
    tpu.vector_store %arg4[%c0_5, %c0_6], %5 {strides = array<i32>} : memref<128x128xf32, #tpu.memory_space<vmem>>, vector<128x128xf32>,
    return
  }
  func.func @transform_0(%arg0: i32) -> (i32, i32) {
    %c0_i32 = arith.constant 0 : i32
    %c0_i32_0 = arith.constant 0 : i32
    return %arg0, %c0_i32 : i32, i32
  }
  func.func @transform_1(%arg0: i32) -> (i32, i32) {
    %c0_i32 = arith.constant 0 : i32
    %c0_i32_0 = arith.constant 0 : i32
    %c0_i32_1 = arith.constant 0 : i32
    return %c0_i32, %c0_i32_0 : i32, i32
  }
  func.func @transform_2(%arg0: i32) -> (i32, i32) {
    %c0_i32 = arith.constant 0 : i32
    %c0_i32_0 = arith.constant 0 : i32
    %c0_i32_1 = arith.constant 0 : i32
    return %c0_i32, %c0_i32_0 : i32, i32
  }
  func.func @transform_3(%arg0: i32) -> (i32, i32) {
    %c0_i32 = arith.constant 0 : i32
    %c0_i32_0 = arith.constant 0 : i32
    return %arg0, %c0_i32 : i32, i32
  }
}

</mosaic_0001>

<llo_original>
// kernel: tpu_custom_call.1
$region0: #{tpu_custom_call.1}
  #allocation0 [shape = 'u32[]', space=smem, size = 0x4, offset = 0x4, fixed_abs, tag = 'smem constant byte address 0x4 - core index']
  #allocation1 [shape = 'u32[144,128]{1,0:T(1,128)}', space=vmem, size = 0x12000, scoped, tag = 'internal scratch']
  %s0 = inlined_call_operand.hbm [shape: bf16[128,128], index: 0, kind: input, shape index: {}]
  %s1 = inlined_call_operand.hbm [shape: bf16[128,128], index: 1, kind: input, shape index: {}]
  %s2 = inlined_call_operand.vmem [shape: f32[1,128], index: 2, kind: input, shape index: {}]
  %s3 = inlined_call_operand.hbm [shape: f32[128,128], index: 3, kind: output, shape index: {}]
  %s4 = sld [smem:[#allocation0]]
  $region30: #{tpu_custom_call.1} parent=0
    _
  %s6 = ssub.s32 1, %s4
  %s7 = scalar_select 0, %s6, %s4
  $region1: #{tpu_custom_call.1} parent=0
    #allocation2 [shape = 'u8[32768]{0}', space=vmem, size = 0x8000, scoped, tag = 'input window, operand 0, single buffered']
    #allocation3 [shape = 's32[1]{0}', space=sflag, size = 0x4, scoped, tag = 'scoped memory for tpu_custom_call.1']
    #allocation4 [shape = 's32[1]{0}', space=sflag, size = 0x4, scoped, tag = 'scoped memory for tpu_custom_call.1']
    #allocation5 [shape = 'u8[32768]{0}', space=vmem, size = 0x8000, scoped, tag = 'input window, operand 1, single buffered']
    #allocation6 [shape = 's32[1]{0}', space=sflag, size = 0x4, scoped, tag = 'scoped memory for tpu_custom_call.1']
    #allocation7 [shape = 'u8[65536]{0}', space=vmem, size = 0x10000, scoped, tag = 'output window, operand 0, single buffered']
    %8 = vsyncpa [#allocation3], 0
    %9 = vsyncpa [#allocation6], 0
    %10 = vsyncpa [#allocation4], 0
    // Predicated region
    $region2: #{tpu_custom_call.1} parent=1 // pred_check
      _
    $region3: #{tpu_custom_call.1} parent=1 // pred_check_branch
      %12 = sbr.rel (0) target = $region5
    $region4: #{tpu_custom_call.1} parent=1 // pred_region
      %s14 = ssub.s32 1024, 1024
      %15 = vsyncadd [#allocation3], %s14
      %s16 = sshll.u32 [#allocation2], 4
      %s17 = int_to_ptr.vmem [resolvable:$true] %s16
      %22 = dma.hbm_to_vmem [thread:$0]  %s0, 1024, %s17, [#allocation3], 64, 64, 4
    $region5: #{tpu_custom_call.1} parent=1 // pred_fallthru
      _
    // Predicated region
    $region6: #{tpu_custom_call.1} parent=1 // pred_check
      _
    $region7: #{tpu_custom_call.1} parent=1 // pred_check_branch
      %24 = sbr.rel (0) target = $region9
    $region8: #{tpu_custom_call.1} parent=1 // pred_region
      %s26 = ssub.s32 1024, 1024
      %27 = vsyncadd [#allocation6], %s26
      %s28 = sshll.u32 [#allocation5], 4
      %s29 = int_to_ptr.vmem [resolvable:$true] %s28
      %34 = dma.hbm_to_vmem [thread:$0]  %s1, 1024, %s29, [#allocation6], 64, 64, 4
    $region9: #{tpu_custom_call.1} parent=1 // pred_fallthru
      _
    // Predicated region
    $region10: #{tpu_custom_call.1} parent=1 // pred_check
      _
    $region11: #{tpu_custom_call.1} parent=1 // pred_check_branch
      %36 = sbr.rel (0) target = $region13
    $region12: #{tpu_custom_call.1} parent=1 // pred_region
      _
    $region13: #{tpu_custom_call.1} parent=1 // pred_fallthru
      _
    // Predicated region
    $region14: #{tpu_custom_call.1} parent=1 // pred_check
      _
    $region15: #{tpu_custom_call.1} parent=1 // pred_check_branch
      %38 = sbr.rel (0) target = $region17
    $region16: #{tpu_custom_call.1} parent=1 // pred_region
      %39 = dma.done [#allocation3], 1024
    $region17: #{tpu_custom_call.1} parent=1 // pred_fallthru
      _
    // Predicated region
    $region18: #{tpu_custom_call.1} parent=1 // pred_check
      _
    $region19: #{tpu_custom_call.1} parent=1 // pred_check_branch
      %41 = sbr.rel (0) target = $region21
    $region20: #{tpu_custom_call.1} parent=1 // pred_region
      %42 = dma.done [#allocation6], 1024
    $region21: #{tpu_custom_call.1} parent=1 // pred_fallthru
      _
    %v44 = vld [vmem:[#allocation2] sm:$0xf]
    %v45 = vld [vmem:[#allocation2 + $0x4] sm:$0xf]
    %v46 = vld [vmem:[#allocation2 + $0x8] sm:$0xf]
    %v47 = vld [vmem:[#allocation2 + $0xc] sm:$0xf]
    %v48 = vld [vmem:[#allocation2 + $0x10] sm:$0xf]
    %v49 = vld [vmem:[#allocation2 + $0x14] sm:$0xf]
    %v50 = vld [vmem:[#allocation2 + $0x18] sm:$0xf]
    %v51 = vld [vmem:[#allocation2 + $0x1c] sm:$0xf]
    %v52 = vld [vmem:[#allocation2 + $0x20] sm:$0xf]
    %v53 = vld [vmem:[#allocation2 + $0x24] sm:$0xf]
    %v54 = vld [vmem:[#allocation2 + $0x28] sm:$0xf]
    %v55 = vld [vmem:[#allocation2 + $0x2c] sm:$0xf]
    %v56 = vld [vmem:[#allocation2 + $0x30] sm:$0xf]
    %v57 = vld [vmem:[#allocation2 + $0x34] sm:$0xf]
    %v58 = vld [vmem:[#allocation2 + $0x38] sm:$0xf]
    %v59 = vld [vmem:[#allocation2 + $0x3c] sm:$0xf]
    %v60 = vld [vmem:[#allocation5] sm:$0xf]
    %v61 = vld [vmem:[#allocation5 + $0x4] sm:$0xf]
    %v62 = vld [vmem:[#allocation5 + $0x8] sm:$0xf]
    %v63 = vld [vmem:[#allocation5 + $0xc] sm:$0xf]
    %v64 = vld [vmem:[#allocation5 + $0x10] sm:$0xf]
    %v65 = vld [vmem:[#allocation5 + $0x14] sm:$0xf]
    %v66 = vld [vmem:[#allocation5 + $0x18] sm:$0xf]
    %v67 = vld [vmem:[#allocation5 + $0x1c] sm:$0xf]
    %v68 = vld [vmem:[#allocation5 + $0x20] sm:$0xf]
    %v69 = vld [vmem:[#allocation5 + $0x24] sm:$0xf]
    %v70 = vld [vmem:[#allocation5 + $0x28] sm:$0xf]
    %v71 = vld [vmem:[#allocation5 + $0x2c] sm:$0xf]
    %v72 = vld [vmem:[#allocation5 + $0x30] sm:$0xf]
    %v73 = vld [vmem:[#allocation5 + $0x34] sm:$0xf]
    %v74 = vld [vmem:[#allocation5 + $0x38] sm:$0xf]
    %v75 = vld [vmem:[#allocation5 + $0x3c] sm:$0xf]
    %v76 = vld [vmem:[%s2] sm:$0x1]
    %v78 = vlaneseq
    %v79 = vshrl.u32 %v78, 7
    %v80 = vsub.s32 0, %v79
    %v81 = vrot.slane %v76, %v80
    %v99 = vunpack.c.l.b16 %v44
    %v100 = vunpack.c.l.b16 %v45
    %v101 = vunpack.c.l.b16 %v46
    %v102 = vunpack.c.l.b16 %v47
    %v103 = vunpack.c.l.b16 %v48
    %v104 = vunpack.c.l.b16 %v49
    %v105 = vunpack.c.l.b16 %v50
    %v106 = vunpack.c.l.b16 %v51
    %v107 = vunpack.c.l.b16 %v52
    %v108 = vunpack.c.l.b16 %v53
    %v109 = vunpack.c.l.b16 %v54
    %v110 = vunpack.c.l.b16 %v55
    %v111 = vunpack.c.l.b16 %v56
    %v112 = vunpack.c.l.b16 %v57
    %v113 = vunpack.c.l.b16 %v58
    %v114 = vunpack.c.l.b16 %v59
    %v115 = vpack.c.b16 %v100, %v99
    %v116 = vpack.c.b16 %v102, %v101
    %v117 = vpack.c.b16 %v104, %v103
    %v118 = vpack.c.b16 %v106, %v105
    %v119 = vpack.c.b16 %v108, %v107
    %v120 = vpack.c.b16 %v110, %v109
    %v121 = vpack.c.b16 %v112, %v111
    %v122 = vpack.c.b16 %v114, %v113
    %v147 = vunpack.c.l.b16 %v60
    %v148 = vunpack.c.l.b16 %v61
    %v149 = vunpack.c.l.b16 %v62
    %v150 = vunpack.c.l.b16 %v63
    %v151 = vunpack.c.l.b16 %v64
    %v152 = vunpack.c.l.b16 %v65
    %v153 = vunpack.c.l.b16 %v66
    %v154 = vunpack.c.l.b16 %v67
    %v155 = vunpack.c.l.b16 %v68
    %v156 = vunpack.c.l.b16 %v69
    %v157 = vunpack.c.l.b16 %v70
    %v158 = vunpack.c.l.b16 %v71
    %v159 = vunpack.c.l.b16 %v72
    %v160 = vunpack.c.l.b16 %v73
    %v161 = vunpack.c.l.b16 %v74
    %v162 = vunpack.c.l.b16 %v75
    %v163 = vpack.c.b16 %v148, %v147
    %v164 = vpack.c.b16 %v150, %v149
    %v165 = vpack.c.b16 %v152, %v151
    %v166 = vpack.c.b16 %v154, %v153
    %v167 = vpack.c.b16 %v156, %v155
    %v168 = vpack.c.b16 %v158, %v157
    %v169 = vpack.c.b16 %v160, %v159
    %v170 = vpack.c.b16 %v162, %v161
    %179 = vmatprep.subr.bf16.mxu0 0
    %180 = vmatpush1.bf16.msra.mxu0 %v163
    %181 = vmatprep.subr.bf16.mxu0 0
    %182 = vmatpush1.bf16.msra.mxu0 %v164
    %183 = vmatprep.subr.bf16.mxu0 0
    %184 = vmatpush1.bf16.msra.mxu0 %v165
    %185 = vmatprep.subr.bf16.mxu0 0
    %186 = vmatpush1.bf16.msra.mxu0 %v166
    %187 = vmatprep.subr.bf16.mxu0 0
    %188 = vmatpush1.bf16.msra.mxu0 %v167
    %189 = vmatprep.subr.bf16.mxu0 0
    %190 = vmatpush1.bf16.msra.mxu0 %v168
    %191 = vmatprep.subr.bf16.mxu0 0
    %192 = vmatpush1.bf16.msra.mxu0 %v169
    %193 = vmatprep.subr.bf16.mxu0 0
    %194 = vmatpush1.bf16.msra.mxu0 %v170
    %195 = vmatprep.subr.bf16.mxu0 0
    %196 = vmatpush1.bf16.msra.mxu0 0
    %197 = vmatprep.subr.bf16.mxu0 0
    %198 = vmatpush1.bf16.msra.mxu0 0
    %199 = vmatprep.subr.bf16.mxu0 0
    %200 = vmatpush1.bf16.msra.mxu0 0
    %201 = vmatprep.subr.bf16.mxu0 0
    %202 = vmatpush1.bf16.msra.mxu0 0
    %203 = vmatprep.subr.bf16.mxu0 0
    %204 = vmatpush1.bf16.msra.mxu0 0
    %205 = vmatprep.subr.bf16.mxu0 0
    %206 = vmatpush1.bf16.msra.mxu0 0
    %207 = vmatprep.subr.bf16.mxu0 0
    %208 = vmatpush1.bf16.msra.mxu0 0
    %209 = vmatprep.subr.bf16.mxu0 0
    %210 = vmatpush1.bf16.msra.mxu0 0
    %211 = vmatprep.mubr.bf16.mxu0 0
    %212 = vmatmul.mubr.bf16.gmra.mrb[0].mxu0 %v115
    %v213 = vpop.f32.mrb[0].mxu0
    %v214 = vadd.f32 %v81, %v213
    %v215 = vpop.f32.mrb[0].mxu0
    %v216 = vpop.f32.mrb[0].mxu0
    %v217 = vadd.f32 %v81, %v216
    %v218 = vpop.f32.mrb[0].mxu0
    %219 = vmatprep.mubr.bf16.mxu0 0
    %220 = vmatmul.mubr.bf16.gmra.mrb[0].mxu0 %v116
    %v221 = vpop.f32.mrb[0].mxu0
    %v222 = vadd.f32 %v81, %v221
    %v223 = vpop.f32.mrb[0].mxu0
    %v224 = vpop.f32.mrb[0].mxu0
    %v225 = vadd.f32 %v81, %v224
    %v226 = vpop.f32.mrb[0].mxu0
    %227 = vmatprep.mubr.bf16.mxu0 0
    %228 = vmatmul.mubr.bf16.gmra.mrb[0].mxu0 %v117
    %v229 = vpop.f32.mrb[0].mxu0
    %v230 = vadd.f32 %v81, %v229
    %v231 = vpop.f32.mrb[0].mxu0
    %v232 = vpop.f32.mrb[0].mxu0
    %v233 = vadd.f32 %v81, %v232
    %v234 = vpop.f32.mrb[0].mxu0
    %235 = vmatprep.mubr.bf16.mxu0 0
    %236 = vmatmul.mubr.bf16.gmra.mrb[0].mxu0 %v118
    %v237 = vpop.f32.mrb[0].mxu0
    %v238 = vadd.f32 %v81, %v237
    %v239 = vpop.f32.mrb[0].mxu0
    %v240 = vpop.f32.mrb[0].mxu0
    %v241 = vadd.f32 %v81, %v240
    %v242 = vpop.f32.mrb[0].mxu0
    %243 = vmatprep.mubr.bf16.mxu0 0
    %244 = vmatmul.mubr.bf16.gmra.mrb[0].mxu0 %v119
    %v245 = vpop.f32.mrb[0].mxu0
    %v246 = vadd.f32 %v81, %v245
    %v247 = vpop.f32.mrb[0].mxu0
    %v248 = vpop.f32.mrb[0].mxu0
    %v249 = vadd.f32 %v81, %v248
    %v250 = vpop.f32.mrb[0].mxu0
    %251 = vmatprep.mubr.bf16.mxu0 0
    %252 = vmatmul.mubr.bf16.gmra.mrb[0].mxu0 %v120
    %v253 = vpop.f32.mrb[0].mxu0
    %v254 = vadd.f32 %v81, %v253
    %v255 = vpop.f32.mrb[0].mxu0
    %v256 = vpop.f32.mrb[0].mxu0
    %v257 = vadd.f32 %v81, %v256
    %v258 = vpop.f32.mrb[0].mxu0
    %259 = vmatprep.mubr.bf16.mxu0 0
    %260 = vmatmul.mubr.bf16.gmra.mrb[0].mxu0 %v121
    %v261 = vpop.f32.mrb[0].mxu0
    %v262 = vadd.f32 %v81, %v261
    %v263 = vpop.f32.mrb[0].mxu0
    %v264 = vpop.f32.mrb[0].mxu0
    %v265 = vadd.f32 %v81, %v264
    %v266 = vpop.f32.mrb[0].mxu0
    %267 = vmatprep.mubr.bf16.mxu0 0
    %268 = vmatmul.mubr.bf16.gmra.mrb[0].mxu0 %v122
    %v269 = vpop.f32.mrb[0].mxu0
    %v270 = vadd.f32 %v81, %v269
    %v271 = vpop.f32.mrb[0].mxu0
    %v272 = vpop.f32.mrb[0].mxu0
    %v273 = vadd.f32 %v81, %v272
    %v274 = vpop.f32.mrb[0].mxu0
    %275 = vdwg.mxu0
    %276 = vst [vmem:[#allocation7] sm:$0xff] %v214
    %277 = vst [vmem:[#allocation7 + $0x8] sm:$0xff] %v217
    %278 = vst [vmem:[#allocation7 + $0x10] sm:$0xff] %v222
    %279 = vst [vmem:[#allocation7 + $0x18] sm:$0xff] %v225
    %280 = vst [vmem:[#allocation7 + $0x20] sm:$0xff] %v230
    %281 = vst [vmem:[#allocation7 + $0x28] sm:$0xff] %v233
    %282 = vst [vmem:[#allocation7 + $0x30] sm:$0xff] %v238
    %283 = vst [vmem:[#allocation7 + $0x38] sm:$0xff] %v241
    %284 = vst [vmem:[#allocation7 + $0x40] sm:$0xff] %v246
    %285 = vst [vmem:[#allocation7 + $0x48] sm:$0xff] %v249
    %286 = vst [vmem:[#allocation7 + $0x50] sm:$0xff] %v254
    %287 = vst [vmem:[#allocation7 + $0x58] sm:$0xff] %v257
    %288 = vst [vmem:[#allocation7 + $0x60] sm:$0xff] %v262
    %289 = vst [vmem:[#allocation7 + $0x68] sm:$0xff] %v265
    %290 = vst [vmem:[#allocation7 + $0x70] sm:$0xff] %v270
    %291 = vst [vmem:[#allocation7 + $0x78] sm:$0xff] %v273
    // Predicated region
    $region22: #{tpu_custom_call.1} parent=1 // pred_check
      _
    $region23: #{tpu_custom_call.1} parent=1 // pred_check_branch
      %293 = sbr.rel (0) target = $region25
    $region24: #{tpu_custom_call.1} parent=1 // pred_region
      %s295 = ssub.s32 2048, 2048
      %296 = vsyncadd [#allocation4], %s295
      %s297 = sshll.u32 [#allocation7], 4
      %s298 = int_to_ptr.vmem [resolvable:$true] %s297
      %303 = dma.vmem_to_hbm [thread:$0]  %s298, 2048, %s3, [#allocation4], 128, 128, 8
    $region25: #{tpu_custom_call.1} parent=1 // pred_fallthru
      _
    // Predicated region
    $region26: #{tpu_custom_call.1} parent=1 // pred_check
      _
    $region27: #{tpu_custom_call.1} parent=1 // pred_check_branch
      %305 = sbr.rel (0) target = $region29
    $region28: #{tpu_custom_call.1} parent=1 // pred_region
      %306 = dma.done [#allocation4], 2048
    $region29: #{tpu_custom_call.1} parent=1 // pred_fallthru
      _
    %307 = vsyncpa [#allocation3], 1
    %308 = vsyncpa [#allocation6], 1
    %309 = vsyncpa [#allocation4], 1

</llo_original>
